<compile_context>
chip_gen: v7x
topology: tpu7x:2x2x1
jax: 0.10.0
libtpu: 0.0.40
codegen_flags: <defaults>
</compile_context>

<pallas_src>
import functools

import jax
import jax.numpy as jnp
from jax.experimental import pallas as pl
from jax.experimental.pallas import tpu as pltpu

PACK = 8  # rows packed into the 128-lane axis (8 * input_dim=16 == 128)


def _round_up(a, m):
    return ((a + m - 1) // m) * m


def dense_encoder_kernel(x_ref, w1_ref, b1_ref, w2_ref, b2_ref, w3_ref, b3_ref,
                         o_ref):
    cdt = x_ref.dtype  # compute dtype for MXU inputs (f32 or bf16)
    # Layer 1 (packed): (tm,128) @ (128,256) -> f32 accumulation on the MXU.
    h = jnp.dot(x_ref[...], w1_ref[...], preferred_element_type=jnp.float32)
    h = jnp.maximum(h + b1_ref[...], 0.0).astype(cdt)
    # Layer 2 (packed): (tm,256) @ (256,256).
    h = jnp.dot(h, w2_ref[...], preferred_element_type=jnp.float32)
    h = jnp.maximum(h + b2_ref[...], 0.0).astype(cdt)
    # Layer 3 (packed): (tm,256) @ (256,192), no trailing activation.
    out = jnp.dot(h, w3_ref[...], preferred_element_type=jnp.float32) + b3_ref[...]
    o_ref[...] = out.astype(o_ref.dtype)


def pack_params(params):
    """Build block-diagonal lane-packed weights ONCE (wrapper side, ~0.6 MB).

    W_blk = kron(I_PACK, W)  (so packed lane-group j of a row maps to original
    row 8r+j), b_blk = tile(b, PACK).  Stored f32; cast to the activation
    dtype at call time (tiny, resident)."""
    eye = jnp.eye(PACK, dtype=jnp.float32)

    def blk(w):
        return jnp.kron(eye, w.astype(jnp.float32))

    def bias(b):
        return jnp.tile(b.astype(jnp.float32), PACK).reshape(1, -1)

    return {
        "w1": blk(params["w1"]), "b1": bias(params["b1"]),
        "w2": blk(params["w2"]), "b2": bias(params["b2"]),
        "w3": blk(params["w3"]), "b3": bias(params["b3"]),
    }


@functools.partial(jax.jit, static_argnames=("tm",))
def dense_encoder_forward(x, packed, *, tm=4096):
    """x: (B, L, D_in) f32 or bf16.  packed: output of pack_params (f32)."""
    B, L, D_in = x.shape
    assert PACK * D_in == packed["w1"].shape[0]
    H_p = packed["w1"].shape[1]          # PACK * hidden_dim
    Dp_out = packed["w3"].shape[1]       # PACK * output_dim
    D_out = Dp_out // PACK

    M = B * L
    M8 = _round_up(M, PACK)
    x2d = x.reshape(M, D_in)
    if M8 != M:
        # TODO(synk): only the ragged M % 8 != 0 case pays this small pad copy;
        # the common case below is copy-free (pure reshapes).
        x2d = jnp.pad(x2d, ((0, M8 - M), (0, 0)))
    M_rows = M8 // PACK
    x_packed = x2d.reshape(M_rows, PACK * D_in)       # free, row-major

    # bf16 x -> bf16 weights so the MXU runs its native bf16 path
    # (f32 x -> no-op).  Biases stay f32, added after f32 accumulation.
    w1 = packed["w1"].astype(x.dtype)
    w2 = packed["w2"].astype(x.dtype)
    w3 = packed["w3"].astype(x.dtype)
    b1, b2, b3 = packed["b1"], packed["b2"], packed["b3"]

    # Packed-row tile: large (amortize ~0.35us/step), multiple of 16 (bf16
    # sublane packing), clamped so the grid has >=4 steps when possible
    # (>=2 steps per v7x TensorCore keeps per-core pipelining alive).
    tm_p = min(max(16, tm // PACK), _round_up(pl.cdiv(M_rows, 4), 16))
    if tm_p >= M_rows:
        tm_p = M_rows  # single full-extent block; any row count is legal.

    grid = (pl.cdiv(M_rows, tm_p),)      # ragged last block handled by Pallas
    out_packed = pl.pallas_call(
        dense_encoder_kernel,
        out_shape=jax.ShapeDtypeStruct((M_rows, Dp_out), x.dtype),
        grid_spec=pltpu.PrefetchScalarGridSpec(
            num_scalar_prefetch=0,
            grid=grid,
            in_specs=[
                pl.BlockSpec((tm_p, PACK * D_in), lambda i: (i, 0)),  # x rows
                pl.BlockSpec((PACK * D_in, H_p), lambda i: (0, 0)),   # W1_blk
                pl.BlockSpec((1, H_p), lambda i: (0, 0)),             # b1_blk
                pl.BlockSpec((H_p, H_p), lambda i: (0, 0)),           # W2_blk
                pl.BlockSpec((1, H_p), lambda i: (0, 0)),             # b2_blk
                pl.BlockSpec((H_p, Dp_out), lambda i: (0, 0)),        # W3_blk
                pl.BlockSpec((1, Dp_out), lambda i: (0, 0)),          # b3_blk
            ],
            out_specs=pl.BlockSpec((tm_p, Dp_out), lambda i: (i, 0)),
        ),
        compiler_params=pltpu.CompilerParams(
            dimension_semantics=("parallel",)),
    )(x_packed, w1, b1, w2, b2, w3, b3)

    out2d = out_packed.reshape(M8, D_out)             # free, row-major
    return out2d[:M].reshape(B, L, D_out)


def init_params(key, input_dim, hidden_dim, output_dim):
    """Deterministic init mimicking nn.Linear (uniform +/- 1/sqrt(fan_in)).
    Weights stored as (in, out) so the forward is x @ W (== x @ W_pt.T)."""
    ks = jax.random.split(key, 6)

    def lin(kw, kb, fan_in, fan_out):
        bound = 1.0 / jnp.sqrt(fan_in)
        w = jax.random.uniform(kw, (fan_in, fan_out), jnp.float32, -bound, bound)
        b = jax.random.uniform(kb, (fan_out,), jnp.float32, -bound, bound)
        return w, b

    w1, b1 = lin(ks[0], ks[1], input_dim, hidden_dim)
    w2, b2 = lin(ks[2], ks[3], hidden_dim, hidden_dim)
    w3, b3 = lin(ks[4], ks[5], hidden_dim, output_dim)
    return {"w1": w1, "b1": b1, "w2": w2, "b2": b2, "w3": w3, "b3": b3}


def reference_forward(x, params):
    x = x.astype(jnp.float32)
    h = jnp.maximum(x @ params["w1"] + params["b1"], 0.0)
    h = jnp.maximum(h @ params["w2"] + params["b2"], 0.0)
    return h @ params["w3"] + params["b3"]


if __name__ == "__main__":
    input_dim, hidden_dim, output_dim = 16, 32, 24
    key = jax.random.PRNGKey(0)
    kx, kp = jax.random.split(key)
    params = init_params(kp, input_dim, hidden_dim, output_dim)
    packed = pack_params(params)   # built once, outside the jitted forward

    # 1) f32: M = 2048 rows -> 256 packed rows -> 4 grid steps of 64
    B, L = 2, 1024
    x = jax.random.normal(kx, (B, L, input_dim), jnp.float32)
    out = jax.block_until_ready(dense_encoder_forward(x, packed))
    ref = reference_forward(x, params)
    assert out.shape == (B, L, output_dim)
    assert jnp.allclose(out, ref, atol=1e-4, rtol=1e-4), "f32 mismatch vs reference"

    # 2) ragged row count: M = 100 -> padded to 104, 13 packed rows, single block
    xr = jax.random.normal(kx, (2, 50, input_dim), jnp.float32)
    outr = jax.block_until_ready(dense_encoder_forward(xr, packed))
    refr = reference_forward(xr, params)
    assert outr.shape == (2, 50, output_dim)
    assert jnp.allclose(outr, refr, atol=1e-4, rtol=1e-4), "ragged mismatch vs reference"

    # 3) bf16 activations + bf16 MXU weight path (f32 accumulation inside)
    xb = x.astype(jnp.bfloat16)
    outb = jax.block_until_ready(dense_encoder_forward(xb, packed))
    refb = reference_forward(xb, params)
    assert outb.dtype == jnp.bfloat16
    assert jnp.allclose(outb.astype(jnp.float32), refb, atol=1e-1, rtol=5e-2), \
        "bf16 mismatch vs reference"

    print("KERNEL_OK")
</pallas_src>

<mosaic_0001>
module attributes {stable_mosaic.version = 11 : i64} {
  func.func @dense_encoder_kernel(%arg0: i32, %arg1: memref<64x128xf32, #tpu.memory_space<vmem>>, %arg2: memref<128x256xf32, #tpu.memory_space<vmem>>, %arg3: memref<1x256xf32, #tpu.memory_space<vmem>>, %arg4: memref<256x256xf32, #tpu.memory_space<vmem>>, %arg5: memref<1x256xf32, #tpu.memory_space<vmem>>, %arg6: memref<256x192xf32, #tpu.memory_space<vmem>>, %arg7: memref<1x192xf32, #tpu.memory_space<vmem>>, %arg8: memref<64x192xf32, #tpu.memory_space<vmem>>) attributes {dimension_semantics = [#tpu.dimension_semantics<parallel>], iteration_bounds = array<i64: 4>, scalar_prefetch = 0 : i64, scratch_operands = 0 : i64, tpu.core_type = #tpu.core_type<tc>, window_params = [{transform_indices = @transform_0, window_bounds = array<i64: 64, 128>}, {pipeline_mode = #tpu.pipeline_mode<synchronous>, transform_indices = @transform_1, window_bounds = array<i64: 128, 256>}, {pipeline_mode = #tpu.pipeline_mode<synchronous>, transform_indices = @transform_2, window_bounds = array<i64: 1, 256>}, {pipeline_mode = #tpu.pipeline_mode<synchronous>, transform_indices = @transform_3, window_bounds = array<i64: 256, 256>}, {pipeline_mode = #tpu.pipeline_mode<synchronous>, transform_indices = @transform_4, window_bounds = array<i64: 1, 256>}, {pipeline_mode = #tpu.pipeline_mode<synchronous>, transform_indices = @transform_5, window_bounds = array<i64: 256, 192>}, {pipeline_mode = #tpu.pipeline_mode<synchronous>, transform_indices = @transform_6, window_bounds = array<i64: 1, 192>}, {transform_indices = @transform_7, window_bounds = array<i64: 64, 192>}]} {
    %c0 = arith.constant 0 : index
    %c0_0 = arith.constant 0 : index
    %0 = vector.load %arg1[%c0, %c0_0] : memref<64x128xf32, #tpu.memory_space<vmem>>, vector<64x128xf32>
    %c0_1 = arith.constant 0 : index
    %c0_2 = arith.constant 0 : index
    %1 = vector.load %arg2[%c0_1, %c0_2] : memref<128x256xf32, #tpu.memory_space<vmem>>, vector<128x256xf32>
    %cst = arith.constant dense<0.000000e+00> : vector<64x256xf32>
    %2 = tpu.matmul %0, %1, %cst {dimension_numbers = #tpu.dot_dimension_numbers<[1], [0], [0], [1], [0, 0, 1, 1], [], []>} : vector<64x128xf32>, vector<128x256xf32>, vector<64x256xf32> -> vector<64x256xf32>
    %c0_3 = arith.constant 0 : index
    %c0_4 = arith.constant 0 : index
    %3 = vector.load %arg3[%c0_3, %c0_4] : memref<1x256xf32, #tpu.memory_space<vmem>>, vector<1x256xf32>
    %4 = vector.broadcast %3 : vector<1x256xf32> to vector<64x256xf32>
    %5 = arith.addf %2, %4 : vector<64x256xf32>
    %cst_5 = arith.constant 0.000000e+00 : f32
    %6 = vector.broadcast %cst_5 : f32 to vector<64x256xf32>
    %7 = arith.maximumf %5, %6 : vector<64x256xf32>
    %c0_6 = arith.constant 0 : index
    %c0_7 = arith.constant 0 : index
    %8 = vector.load %arg4[%c0_6, %c0_7] : memref<256x256xf32, #tpu.memory_space<vmem>>, vector<256x256xf32>
    %cst_8 = arith.constant dense<0.000000e+00> : vector<64x256xf32>
    %9 = tpu.matmul %7, %8, %cst_8 {dimension_numbers = #tpu.dot_dimension_numbers<[1], [0], [0], [1], [0, 0, 1, 1], [], []>} : vector<64x256xf32>, vector<256x256xf32>, vector<64x256xf32> -> vector<64x256xf32>
    %c0_9 = arith.constant 0 : index
    %c0_10 = arith.constant 0 : index
    %10 = vector.load %arg5[%c0_9, %c0_10] : memref<1x256xf32, #tpu.memory_space<vmem>>, vector<1x256xf32>
    %11 = vector.broadcast %10 : vector<1x256xf32> to vector<64x256xf32>
    %12 = arith.addf %9, %11 : vector<64x256xf32>
    %cst_11 = arith.constant 0.000000e+00 : f32
    %13 = vector.broadcast %cst_11 : f32 to vector<64x256xf32>
    %14 = arith.maximumf %12, %13 : vector<64x256xf32>
    %c0_12 = arith.constant 0 : index
    %c0_13 = arith.constant 0 : index
    %15 = vector.load %arg6[%c0_12, %c0_13] : memref<256x192xf32, #tpu.memory_space<vmem>>, vector<256x192xf32>
    %cst_14 = arith.constant dense<0.000000e+00> : vector<64x192xf32>
    %16 = tpu.matmul %14, %15, %cst_14 {dimension_numbers = #tpu.dot_dimension_numbers<[1], [0], [0], [1], [0, 0, 1, 1], [], []>} : vector<64x256xf32>, vector<256x192xf32>, vector<64x192xf32> -> vector<64x192xf32>
    %c0_15 = arith.constant 0 : index
    %c0_16 = arith.constant 0 : index
    %17 = vector.load %arg7[%c0_15, %c0_16] : memref<1x192xf32, #tpu.memory_space<vmem>>, vector<1x192xf32>
    %18 = vector.broadcast %17 : vector<1x192xf32> to vector<64x192xf32>
    %19 = arith.addf %16, %18 : vector<64x192xf32>
    %c0_17 = arith.constant 0 : index
    %c0_18 = arith.constant 0 : index
    %20 = vector.load %arg8[%c0_17, %c0_18] : memref<64x192xf32, #tpu.memory_space<vmem>>, vector<64x192xf32>
    tpu.vector_store %arg8[%c0_17, %c0_18], %19 {strides = array<i32>} : memref<64x192xf32, #tpu.memory_space<vmem>>, vector<64x192xf32>,
    return
  }
  func.func @transform_0(%arg0: i32) -> (i32, i32) {
    %c0_i32 = arith.constant 0 : i32
    %c0_i32_0 = arith.constant 0 : i32
    return %arg0, %c0_i32 : i32, i32
  }
  func.func @transform_1(%arg0: i32) -> (i32, i32) {
    %c0_i32 = arith.constant 0 : i32
    %c0_i32_0 = arith.constant 0 : i32
    %c0_i32_1 = arith.constant 0 : i32
    return %c0_i32, %c0_i32_0 : i32, i32
  }
  func.func @transform_2(%arg0: i32) -> (i32, i32) {
    %c0_i32 = arith.constant 0 : i32
    %c0_i32_0 = arith.constant 0 : i32
    %c0_i32_1 = arith.constant 0 : i32
    return %c0_i32, %c0_i32_0 : i32, i32
  }
  func.func @transform_3(%arg0: i32) -> (i32, i32) {
    %c0_i32 = arith.constant 0 : i32
    %c0_i32_0 = arith.constant 0 : i32
    %c0_i32_1 = arith.constant 0 : i32
    return %c0_i32, %c0_i32_0 : i32, i32
  }
  func.func @transform_4(%arg0: i32) -> (i32, i32) {
    %c0_i32 = arith.constant 0 : i32
    %c0_i32_0 = arith.constant 0 : i32
    %c0_i32_1 = arith.constant 0 : i32
    return %c0_i32, %c0_i32_0 : i32, i32
  }
  func.func @transform_5(%arg0: i32) -> (i32, i32) {
    %c0_i32 = arith.constant 0 : i32
    %c0_i32_0 = arith.constant 0 : i32
    %c0_i32_1 = arith.constant 0 : i32
    return %c0_i32, %c0_i32_0 : i32, i32
  }
  func.func @transform_6(%arg0: i32) -> (i32, i32) {
    %c0_i32 = arith.constant 0 : i32
    %c0_i32_0 = arith.constant 0 : i32
    %c0_i32_1 = arith.constant 0 : i32
    return %c0_i32, %c0_i32_0 : i32, i32
  }
  func.func @transform_7(%arg0: i32) -> (i32, i32) {
    %c0_i32 = arith.constant 0 : i32
    %c0_i32_0 = arith.constant 0 : i32
    return %arg0, %c0_i32 : i32, i32
  }
}

</mosaic_0001>

<llo_original>
// kernel: dense_encoder_forward.1
$region0: #{dense_encoder_forward.1}
  #allocation0 [shape = 'u32[]', space=smem, size = 0x4, offset = 0x4, fixed_abs, tag = 'smem constant byte address 0x4 - core index']
  #allocation1 [shape = 'u32[144,128]{1,0:T(1,128)}', space=vmem, size = 0x12000, scoped, tag = 'internal scratch']
  %s0 = inlined_call_operand.vmem [shape: f32[256,128], index: 0, kind: input, shape index: {}]
  %s1 = inlined_call_operand.vmem [shape: f32[128,256], index: 1, kind: input, shape index: {}]
  %s2 = inlined_call_operand.vmem [shape: f32[1,256], index: 2, kind: input, shape index: {}]
  %s3 = inlined_call_operand.vmem [shape: f32[256,256], index: 3, kind: input, shape index: {}]
  %s4 = inlined_call_operand.vmem [shape: f32[1,256], index: 4, kind: input, shape index: {}]
  %s5 = inlined_call_operand.vmem [shape: f32[256,192], index: 5, kind: input, shape index: {}]
  %s6 = inlined_call_operand.vmem [shape: f32[1,192], index: 6, kind: input, shape index: {}]
  %s7 = inlined_call_operand.vmem [shape: f32[256,192], index: 7, kind: output, shape index: {}]
  %s8 = sld [smem:[#allocation0]]
  $region61: #{dense_encoder_forward.1} parent=0
    _
  %s10 = ssub.s32 1, %s8
  %s11 = scalar_select 0, %s10, %s8
  loop: start=0, step=1, limit=6
  $region2: #{dense_encoder_forward.1} parent=0 // loop_pre_header
    _
  $region3: #{dense_encoder_forward.1} parent=0 // loop_header
    %s13 = sphi 0, %s17
    %p14 = scmp.ge.s32.totalorder %s13, 6
    %s23 = sphi 0, %s25
    %s26 = sphi 0, %s23
    %s27 = sphi 0, %s26
    %s43 = sphi 0, %s27
    %s47 = sphi 0, %s47
    %s49 = sphi 0, %s47
    %s50 = sphi 0, %s49
    %s64 = sphi 0, %s50
    %s68 = sphi 0, %s68
    %s70 = sphi 0, %s68
    %s71 = sphi 0, %s70
    %s85 = sphi 0, %s71
    %s89 = sphi 0, %s89
    %s91 = sphi 0, %s89
    %s92 = sphi 0, %s91
    %s106 = sphi 0, %s92
    %s110 = sphi 0, %s110
    %s112 = sphi 0, %s110
    %s113 = sphi 0, %s112
    %s127 = sphi 0, %s113
    %s131 = sphi 0, %s131
    %s133 = sphi 0, %s131
    %s134 = sphi 0, %s133
    %s148 = sphi 0, %s134
    %s152 = sphi 0, %s152
    %s154 = sphi 0, %s152
    %s155 = sphi 0, %s154
    %s169 = sphi 0, %s155
    %s175 = sphi 0, %s177
    %s178 = sphi 0, %s175
    %s179 = sphi 0, %s178
    %s195 = sphi 0, %s179
  $region4: #{dense_encoder_forward.1} parent=0 // loop_header_branch
    %16 = sbr.rel (%p14) target = $region8
  $region5: #{dense_encoder_forward.1} parent=0 // loop_body
    %s18 = ssub.s32 %s13, 1
    %s19 = ssub.s32 %s13, 2
    %s20 = sadd.s32 %s13, 1
    %s21 = ssub.s32 %s13, %s20
    %p22 = scmp.eq.s32.totalorder %s21, 0
    %s24 = sadd.s32 %s23, 1
    %s25 = scalar_select %p22, %s23, %s24
    %p28 = pneg %p22
    %p29 = scmp.eq.s32.totalorder %s13, 3
    %p30 = por %p28, %p29
    %p31 = scmp.ne.s32.totalorder %s23, %s26
    %p32 = scmp.eq.s32.totalorder %s13, 0
    %p33 = por %p31, %p32
    %p34 = scmp.ne.s32.totalorder %s23, %s26
    %p35 = scmp.eq.s32.totalorder %s18, 3
    %p36 = por %p34, %p35
    %p37 = scmp.ne.s32.totalorder %s26, %s27
    %p38 = scmp.eq.s32.totalorder %s18, 0
    %p39 = por %p37, %p38
    %p40 = scmp.ne.s32.totalorder %s26, %s27
    %p41 = scmp.eq.s32.totalorder %s19, 3
    %p42 = por %p40, %p41
    %p44 = scmp.ne.s32.totalorder %s27, %s43
    %p45 = scmp.eq.s32.totalorder %s19, 0
    %p46 = por %p44, %p45
    %s48 = sadd.s32 %s47, 1
    %p51 = scmp.eq.s32.totalorder %s13, 3
    %p52 = scmp.ne.s32.totalorder %s47, %s49
    %p53 = scmp.eq.s32.totalorder %s13, 0
    %p54 = por %p52, %p53
    %p55 = scmp.ne.s32.totalorder %s47, %s49
    %p56 = scmp.eq.s32.totalorder %s18, 3
    %p57 = por %p55, %p56
    %p58 = scmp.ne.s32.totalorder %s49, %s50
    %p59 = scmp.eq.s32.totalorder %s18, 0
    %p60 = por %p58, %p59
    %p61 = scmp.ne.s32.totalorder %s49, %s50
    %p62 = scmp.eq.s32.totalorder %s19, 3
    %p63 = por %p61, %p62
    %p65 = scmp.ne.s32.totalorder %s50, %s64
    %p66 = scmp.eq.s32.totalorder %s19, 0
    %p67 = por %p65, %p66
    %s69 = sadd.s32 %s68, 1
    %p72 = scmp.eq.s32.totalorder %s13, 3
    %p73 = scmp.ne.s32.totalorder %s68, %s70
    %p74 = scmp.eq.s32.totalorder %s13, 0
    %p75 = por %p73, %p74
    %p76 = scmp.ne.s32.totalorder %s68, %s70
    %p77 = scmp.eq.s32.totalorder %s18, 3
    %p78 = por %p76, %p77
    %p79 = scmp.ne.s32.totalorder %s70, %s71
    %p80 = scmp.eq.s32.totalorder %s18, 0
    %p81 = por %p79, %p80
    %p82 = scmp.ne.s32.totalorder %s70, %s71
    %p83 = scmp.eq.s32.totalorder %s19, 3
    %p84 = por %p82, %p83
    %p86 = scmp.ne.s32.totalorder %s71, %s85
    %p87 = scmp.eq.s32.totalorder %s19, 0
    %p88 = por %p86, %p87
    %s90 = sadd.s32 %s89, 1
    %p93 = scmp.eq.s32.totalorder %s13, 3
    %p94 = scmp.ne.s32.totalorder %s89, %s91
    %p95 = scmp.eq.s32.totalorder %s13, 0
    %p96 = por %p94, %p95
    %p97 = scmp.ne.s32.totalorder %s89, %s91
    %p98 = scmp.eq.s32.totalorder %s18, 3
    %p99 = por %p97, %p98
    %p100 = scmp.ne.s32.totalorder %s91, %s92
    %p101 = scmp.eq.s32.totalorder %s18, 0
    %p102 = por %p100, %p101
    %p103 = scmp.ne.s32.totalorder %s91, %s92
    %p104 = scmp.eq.s32.totalorder %s19, 3
    %p105 = por %p103, %p104
    %p107 = scmp.ne.s32.totalorder %s92, %s106
    %p108 = scmp.eq.s32.totalorder %s19, 0
    %p109 = por %p107, %p108
    %s111 = sadd.s32 %s110, 1
    %p114 = scmp.eq.s32.totalorder %s13, 3
    %p115 = scmp.ne.s32.totalorder %s110, %s112
    %p116 = scmp.eq.s32.totalorder %s13, 0
    %p117 = por %p115, %p116
    %p118 = scmp.ne.s32.totalorder %s110, %s112
    %p119 = scmp.eq.s32.totalorder %s18, 3
    %p120 = por %p118, %p119
    %p121 = scmp.ne.s32.totalorder %s112, %s113
    %p122 = scmp.eq.s32.totalorder %s18, 0
    %p123 = por %p121, %p122
    %p124 = scmp.ne.s32.totalorder %s112, %s113
    %p125 = scmp.eq.s32.totalorder %s19, 3
    %p126 = por %p124, %p125
    %p128 = scmp.ne.s32.totalorder %s113, %s127
    %p129 = scmp.eq.s32.totalorder %s19, 0
    %p130 = por %p128, %p129
    %s132 = sadd.s32 %s131, 1
    %p135 = scmp.eq.s32.totalorder %s13, 3
    %p136 = scmp.ne.s32.totalorder %s131, %s133
    %p137 = scmp.eq.s32.totalorder %s13, 0
    %p138 = por %p136, %p137
    %p139 = scmp.ne.s32.totalorder %s131, %s133
    %p140 = scmp.eq.s32.totalorder %s18, 3
    %p141 = por %p139, %p140
    %p142 = scmp.ne.s32.totalorder %s133, %s134
    %p143 = scmp.eq.s32.totalorder %s18, 0
    %p144 = por %p142, %p143
    %p145 = scmp.ne.s32.totalorder %s133, %s134
    %p146 = scmp.eq.s32.totalorder %s19, 3
    %p147 = por %p145, %p146
    %p149 = scmp.ne.s32.totalorder %s134, %s148
    %p150 = scmp.eq.s32.totalorder %s19, 0
    %p151 = por %p149, %p150
    %s153 = sadd.s32 %s152, 1
    %p156 = scmp.eq.s32.totalorder %s13, 3
    %p157 = scmp.ne.s32.totalorder %s152, %s154
    %p158 = scmp.eq.s32.totalorder %s13, 0
    %p159 = por %p157, %p158
    %p160 = scmp.ne.s32.totalorder %s152, %s154
    %p161 = scmp.eq.s32.totalorder %s18, 3
    %p162 = por %p160, %p161
    %p163 = scmp.ne.s32.totalorder %s154, %s155
    %p164 = scmp.eq.s32.totalorder %s18, 0
    %p165 = por %p163, %p164
    %p166 = scmp.ne.s32.totalorder %s154, %s155
    %p167 = scmp.eq.s32.totalorder %s19, 3
    %p168 = por %p166, %p167
    %p170 = scmp.ne.s32.totalorder %s155, %s169
    %p171 = scmp.eq.s32.totalorder %s19, 0
    %p172 = por %p170, %p171
    %s173 = ssub.s32 %s13, %s20
    %p174 = scmp.eq.s32.totalorder %s173, 0
    %s176 = sadd.s32 %s175, 1
    %s177 = scalar_select %p174, %s175, %s176
    %p180 = pneg %p174
    %p181 = scmp.eq.s32.totalorder %s13, 3
    %p182 = por %p180, %p181
    %p183 = scmp.ne.s32.totalorder %s175, %s178
    %p184 = scmp.eq.s32.totalorder %s13, 0
    %p185 = por %p183, %p184
    %p186 = scmp.ne.s32.totalorder %s175, %s178
    %p187 = scmp.eq.s32.totalorder %s18, 3
    %p188 = por %p186, %p187
    %p189 = scmp.ne.s32.totalorder %s178, %s179
    %p190 = scmp.eq.s32.totalorder %s18, 0
    %p191 = por %p189, %p190
    %p192 = scmp.ne.s32.totalorder %s178, %s179
    %p193 = scmp.eq.s32.totalorder %s19, 3
    %p194 = por %p192, %p193
    %p196 = scmp.ne.s32.totalorder %s179, %s195
    %p197 = scmp.eq.s32.totalorder %s19, 0
    %p198 = por %p196, %p197
    %p199 = scmp.le.s32.totalorder 1, %s13
    %p200 = scmp.lt.s32.totalorder %s13, 5
    %p201 = pnand %p199, %p200
    %p202 = pneg %p201
    // Predicated region
    $region9: #{dense_encoder_forward.1} parent=5 // pred_check
      _
    $region10: #{dense_encoder_forward.1} parent=5 // pred_check_branch
      %204 = sbr.rel (%p201) target = $region12
    $region11: #{dense_encoder_forward.1} parent=5 // pred_region
      %s205 = ssub.s32 %s13, 1
      // Predicated region
      $region13: #{dense_encoder_forward.1} parent=11 // pred_check
        %p206 = pneg %p60
      $region14: #{dense_encoder_forward.1} parent=11 // pred_check_branch
        %208 = sbr.rel (%p206) target = $region16
      $region15: #{dense_encoder_forward.1} parent=11 // pred_region
        _
      $region16: #{dense_encoder_forward.1} parent=11 // pred_fallthru
        _
      // Predicated region
      $region17: #{dense_encoder_forward.1} parent=11 // pred_check
        %p209 = pneg %p81
      $region18: #{dense_encoder_forward.1} parent=11 // pred_check_branch
        %211 = sbr.rel (%p209) target = $region20
      $region19: #{dense_encoder_forward.1} parent=11 // pred_region
        _
      $region20: #{dense_encoder_forward.1} parent=11 // pred_fallthru
        _
      // Predicated region
      $region21: #{dense_encoder_forward.1} parent=11 // pred_check
        %p212 = pneg %p102
      $region22: #{dense_encoder_forward.1} parent=11 // pred_check_branch
        %214 = sbr.rel (%p212) target = $region24
      $region23: #{dense_encoder_forward.1} parent=11 // pred_region
        _
      $region24: #{dense_encoder_forward.1} parent=11 // pred_fallthru
        _
      // Predicated region
      $region25: #{dense_encoder_forward.1} parent=11 // pred_check
        %p215 = pneg %p123
      $region26: #{dense_encoder_forward.1} parent=11 // pred_check_branch
        %217 = sbr.rel (%p215) target = $region28
      $region27: #{dense_encoder_forward.1} parent=11 // pred_region
        _
      $region28: #{dense_encoder_forward.1} parent=11 // pred_fallthru
        _
      // Predicated region
      $region29: #{dense_encoder_forward.1} parent=11 // pred_check
        %p218 = pneg %p144
      $region30: #{dense_encoder_forward.1} parent=11 // pred_check_branch
        %220 = sbr.rel (%p218) target = $region32
      $region31: #{dense_encoder_forward.1} parent=11 // pred_region
        _
      $region32: #{dense_encoder_forward.1} parent=11 // pred_fallthru
        _
      // Predicated region
      $region33: #{dense_encoder_forward.1} parent=11 // pred_check
        %p221 = pneg %p165
      $region34: #{dense_encoder_forward.1} parent=11 // pred_check_branch
        %223 = sbr.rel (%p221) target = $region36
      $region35: #{dense_encoder_forward.1} parent=11 // pred_region
        _
      $region36: #{dense_encoder_forward.1} parent=11 // pred_fallthru
        _
    $region12: #{dense_encoder_forward.1} parent=5 // pred_fallthru
      _
    %p224 = scmp.lt.s32.totalorder %s13, 4
    // Predicated region
    $region37: #{dense_encoder_forward.1} parent=5 // pred_check
      %p225 = pneg %p224
    $region38: #{dense_encoder_forward.1} parent=5 // pred_check_branch
      %227 = sbr.rel (%p225) target = $region40
    $region39: #{dense_encoder_forward.1} parent=5 // pred_region
      // Predicated region
      $region41: #{dense_encoder_forward.1} parent=39 // pred_check
        %p228 = pneg %p33
      $region42: #{dense_encoder_forward.1} parent=39 // pred_check_branch
        %230 = sbr.rel (%p228) target = $region44
      $region43: #{dense_encoder_forward.1} parent=39 // pred_region
        %s231 = smul.u32 8, %s13
        %p232 = scmp.lt.s32.totalorder %s231, 31
        %s233 = scalar_select %p232, %s231, 31
        %s234 = smul.addr %s233, 8
        %s235 = scalar_lea.vmem %s0, %s234
        %s236 = smul.u32 8, %s13
      $region44: #{dense_encoder_forward.1} parent=39 // pred_fallthru
        _
    $region40: #{dense_encoder_forward.1} parent=5 // pred_fallthru
      _
    %p237 = scmp.le.s32.totalorder 1, %s13
    %p238 = scmp.lt.s32.totalorder %s13, 5
    %p239 = pnand %p237, %p238
    %p240 = pneg %p239
    // Predicated region
    $region45: #{dense_encoder_forward.1} parent=5 // pred_check
      _
    $region46: #{dense_encoder_forward.1} parent=5 // pred_check_branch
      %242 = sbr.rel (%p239) target = $region48
    $region47: #{dense_encoder_forward.1} parent=5 // pred_region
      %s243 = ssub.s32 %s13, 1
      %s244 = smul.u32 8, %s18
      %p245 = scmp.lt.s32.totalorder %s244, 31
      %s246 = scalar_select %p245, %s244, 31
      %s247 = smul.addr %s246, 8
      %s248 = scalar_lea.vmem %s0, %s247
      %p249 = pneg %p39
      %p250 = pneg %p36
      %p251 = pneg %p60
      %p252 = pneg %p57
      %p253 = pneg %p81
      %p254 = pneg %p78
      %p255 = pneg %p102
      %p256 = pneg %p99
      %p257 = pneg %p123
      %p258 = pneg %p120
      %p259 = pneg %p144
      %p260 = pneg %p141
      %p261 = pneg %p165
      %p262 = pneg %p162
      %p263 = pneg %p191
      %p264 = pneg %p188
      %s265 = smul.u32 8, %s18
      %p266 = scmp.lt.s32.totalorder %s265, 31
      %s267 = scalar_select %p266, %s265, 31
      %s268 = smul.addr %s267, 2
      %s269 = smul.addr %s268, 8
      %s270 = scalar_lea.vmem %s7, %s269
      %s271 = smul.u32 8, %s18
      %p272 = scmp.lt.s32.totalorder %s271, 31
      %s273 = scalar_select %p272, %s271, 31
      %s274 = smul.addr %s273, 8
      %s275 = scalar_lea.vmem %s0, %s274
      %s276 = smul.u32 8, %s18
      %s277 = smul.u32 8, %s18
      %p278 = scmp.lt.s32.totalorder %s277, 31
      %s279 = scalar_select %p278, %s277, 31
      %s280 = smul.addr %s279, 2
      %s281 = smul.addr %s280, 8
      %s282 = scalar_lea.vmem %s7, %s281
      %s283 = smul.u32 8, %s18
      %v284 = vld [vmem:[%s275] sm:$0xff]
      %v285 = vld [vmem:[%s275 + $0x8] sm:$0xff]
      %v286 = vld [vmem:[%s275 + $0x10] sm:$0xff]
      %v287 = vld [vmem:[%s275 + $0x18] sm:$0xff]
      %v288 = vld [vmem:[%s275 + $0x20] sm:$0xff]
      %v289 = vld [vmem:[%s275 + $0x28] sm:$0xff]
      %v290 = vld [vmem:[%s275 + $0x30] sm:$0xff]
      %v291 = vld [vmem:[%s275 + $0x38] sm:$0xff]
      %v292 = vld [vmem:[%s1] sm:$0xff]
      %v293 = vld [vmem:[%s1 + $0x8] sm:$0xff]
      %v294 = vld [vmem:[%s1 + $0x10] sm:$0xff]
      %v295 = vld [vmem:[%s1 + $0x18] sm:$0xff]
      %v296 = vld [vmem:[%s1 + $0x20] sm:$0xff]
      %v297 = vld [vmem:[%s1 + $0x28] sm:$0xff]
      %v298 = vld [vmem:[%s1 + $0x30] sm:$0xff]
      %v299 = vld [vmem:[%s1 + $0x38] sm:$0xff]
      %v300 = vld [vmem:[%s1 + $0x40] sm:$0xff]
      %v301 = vld [vmem:[%s1 + $0x48] sm:$0xff]
      %v302 = vld [vmem:[%s1 + $0x50] sm:$0xff]
      %v303 = vld [vmem:[%s1 + $0x58] sm:$0xff]
      %v304 = vld [vmem:[%s1 + $0x60] sm:$0xff]
      %v305 = vld [vmem:[%s1 + $0x68] sm:$0xff]
      %v306 = vld [vmem:[%s1 + $0x70] sm:$0xff]
      %v307 = vld [vmem:[%s1 + $0x78] sm:$0xff]
      %v308 = vld [vmem:[%s1 + $0x80] sm:$0xff]
      %v309 = vld [vmem:[%s1 + $0x88] sm:$0xff]
      %v310 = vld [vmem:[%s1 + $0x90] sm:$0xff]
      %v311 = vld [vmem:[%s1 + $0x98] sm:$0xff]
      %v312 = vld [vmem:[%s1 + $0xa0] sm:$0xff]
      %v313 = vld [vmem:[%s1 + $0xa8] sm:$0xff]
      %v314 = vld [vmem:[%s1 + $0xb0] sm:$0xff]
      %v315 = vld [vmem:[%s1 + $0xb8] sm:$0xff]
      %v316 = vld [vmem:[%s1 + $0xc0] sm:$0xff]
      %v317 = vld [vmem:[%s1 + $0xc8] sm:$0xff]
      %v318 = vld [vmem:[%s1 + $0xd0] sm:$0xff]
      %v319 = vld [vmem:[%s1 + $0xd8] sm:$0xff]
      %v320 = vld [vmem:[%s1 + $0xe0] sm:$0xff]
      %v321 = vld [vmem:[%s1 + $0xe8] sm:$0xff]
      %v322 = vld [vmem:[%s1 + $0xf0] sm:$0xff]
      %v323 = vld [vmem:[%s1 + $0xf8] sm:$0xff]
      %v324 = vld [vmem:[%s2] sm:$0x3]
      %v326 = vlaneseq
      %v327 = vshrl.u32 %v326, 7
      %v328 = vsub.s32 0, %v327
      %v329 = vrot.slane %v324, %v328
      %v330 = vlaneseq
      %v331 = vshrl.u32 %v330, 7
      %v332 = vsub.s32 1, %v331
      %v333 = vrot.slane %v324, %v332
      %336 = vmatprep.subr.mxu0 %v293
      %337 = vmatpush1.msra.mxu0 %v292
      %338 = vmatprep.subr.mxu0 %v295
      %339 = vmatpush1.msra.mxu0 %v294
      %340 = vmatprep.subr.mxu0 %v297
      %341 = vmatpush1.msra.mxu0 %v296
      %342 = vmatprep.subr.mxu0 %v299
      %343 = vmatpush1.msra.mxu0 %v298
      %344 = vmatprep.subr.mxu0 %v301
      %345 = vmatpush1.msra.mxu0 %v300
      %346 = vmatprep.subr.mxu0 %v303
      %347 = vmatpush1.msra.mxu0 %v302
      %348 = vmatprep.subr.mxu0 %v305
      %349 = vmatpush1.msra.mxu0 %v304
      %350 = vmatprep.subr.mxu0 %v307
      %351 = vmatpush1.msra.mxu0 %v306
      %352 = vmatprep.subr.mxu0 %v309
      %353 = vmatpush1.msra.mxu0 %v308
      %354 = vmatprep.subr.mxu0 %v311
      %355 = vmatpush1.msra.mxu0 %v310
      %356 = vmatprep.subr.mxu0 %v313
      %357 = vmatpush1.msra.mxu0 %v312
      %358 = vmatprep.subr.mxu0 %v315
      %359 = vmatpush1.msra.mxu0 %v314
      %360 = vmatprep.subr.mxu0 %v317
      %361 = vmatpush1.msra.mxu0 %v316
      %362 = vmatprep.subr.mxu0 %v319
      %363 = vmatpush1.msra.mxu0 %v318
      %364 = vmatprep.subr.mxu0 %v321
      %365 = vmatpush1.msra.mxu0 %v320
      %366 = vmatprep.subr.mxu0 %v323
      %367 = vmatpush1.msra.mxu0 %v322
      %368 = vmatprep.subr.mxu0 0.0
      %369 = vmatpush1.msra.mxu0 0.0
      %370 = vmatprep.subr.mxu0 0.0
      %371 = vmatpush1.msra.mxu0 0.0
      %372 = vmatprep.subr.mxu0 0.0
      %373 = vmatpush1.msra.mxu0 0.0
      %374 = vmatprep.subr.mxu0 0.0
      %375 = vmatpush1.msra.mxu0 0.0
      %376 = vmatprep.subr.mxu0 0.0
      %377 = vmatpush1.msra.mxu0 0.0
      %378 = vmatprep.subr.mxu0 0.0
      %379 = vmatpush1.msra.mxu0 0.0
      %380 = vmatprep.subr.mxu0 0.0
      %381 = vmatpush1.msra.mxu0 0.0
      %382 = vmatprep.subr.mxu0 0.0
      %383 = vmatpush1.msra.mxu0 0.0
      %384 = vmatprep.subr.mxu0 0.0
      %385 = vmatpush1.msra.mxu0 0.0
      %386 = vmatprep.subr.mxu0 0.0
      %387 = vmatpush1.msra.mxu0 0.0
      %388 = vmatprep.subr.mxu0 0.0
      %389 = vmatpush1.msra.mxu0 0.0
      %390 = vmatprep.subr.mxu0 0.0
      %391 = vmatpush1.msra.mxu0 0.0
      %392 = vmatprep.subr.mxu0 0.0
      %393 = vmatpush1.msra.mxu0 0.0
      %394 = vmatprep.subr.mxu0 0.0
      %395 = vmatpush1.msra.mxu0 0.0
      %396 = vmatprep.subr.mxu0 0.0
      %397 = vmatpush1.msra.mxu0 0.0
      %398 = vmatprep.subr.mxu0 0.0
      %399 = vmatpush1.msra.mxu0 0.0
      %400 = vmatprep.mubr.f32.mxu0 0.0
      %401 = vmatmul.mubr.f32.gmra.mrb[0].mxu0 %v284
      %v402 = vpop.f32.mrb[0].mxu0
      %v403 = vadd.f32 %v329, %v402
      %v404 = vpop.f32.mrb[0].mxu0
      %v405 = vadd.f32 %v333, %v404
      %406 = vmatprep.mubr.f32.mxu0 0.0
      %407 = vmatmul.mubr.f32.gmra.mrb[0].mxu0 %v285
      %v408 = vpop.f32.mrb[0].mxu0
      %v409 = vadd.f32 %v329, %v408
      %v410 = vpop.f32.mrb[0].mxu0
      %v411 = vadd.f32 %v333, %v410
      %412 = vmatprep.mubr.f32.mxu0 0.0
      %413 = vmatmul.mubr.f32.gmra.mrb[0].mxu0 %v286
      %v414 = vpop.f32.mrb[0].mxu0
      %v415 = vadd.f32 %v329, %v414
      %v416 = vpop.f32.mrb[0].mxu0
      %v417 = vadd.f32 %v333, %v416
      %418 = vmatprep.mubr.f32.mxu0 0.0
      %419 = vmatmul.mubr.f32.gmra.mrb[0].mxu0 %v287
      %v420 = vpop.f32.mrb[0].mxu0
      %v421 = vadd.f32 %v329, %v420
      %v422 = vpop.f32.mrb[0].mxu0
      %v423 = vadd.f32 %v333, %v422
      %424 = vmatprep.mubr.f32.mxu0 0.0
      %425 = vmatmul.mubr.f32.gmra.mrb[0].mxu0 %v288
      %v426 = vpop.f32.mrb[0].mxu0
      %v427 = vadd.f32 %v329, %v426
      %v428 = vpop.f32.mrb[0].mxu0
      %v429 = vadd.f32 %v333, %v428
      %430 = vmatprep.mubr.f32.mxu0 0.0
      %431 = vmatmul.mubr.f32.gmra.mrb[0].mxu0 %v289
      %v432 = vpop.f32.mrb[0].mxu0
      %v433 = vadd.f32 %v329, %v432
      %v434 = vpop.f32.mrb[0].mxu0
      %v435 = vadd.f32 %v333, %v434
      %436 = vmatprep.mubr.f32.mxu0 0.0
      %437 = vmatmul.mubr.f32.gmra.mrb[0].mxu0 %v290
      %v438 = vpop.f32.mrb[0].mxu0
      %v439 = vadd.f32 %v329, %v438
      %v440 = vpop.f32.mrb[0].mxu0
      %v441 = vadd.f32 %v333, %v440
      %442 = vmatprep.mubr.f32.mxu0 0.0
      %443 = vmatmul.mubr.f32.gmra.mrb[0].mxu0 %v291
      %v444 = vpop.f32.mrb[0].mxu0
      %v445 = vadd.f32 %v329, %v444
      %v446 = vpop.f32.mrb[0].mxu0
      %v447 = vadd.f32 %v333, %v446
      %448 = vdwg.mxu0
      %v449 = vmax.f32 %v403, 0.0
      %v450 = vmax.f32 %v405, 0.0
      %v451 = vmax.f32 %v409, 0.0
      %v452 = vmax.f32 %v411, 0.0
      %v453 = vmax.f32 %v415, 0.0
      %v454 = vmax.f32 %v417, 0.0
      %v455 = vmax.f32 %v421, 0.0
      %v456 = vmax.f32 %v423, 0.0
      %v457 = vmax.f32 %v427, 0.0
      %v458 = vmax.f32 %v429, 0.0
      %v459 = vmax.f32 %v433, 0.0
      %v460 = vmax.f32 %v435, 0.0
      %v461 = vmax.f32 %v439, 0.0
      %v462 = vmax.f32 %v441, 0.0
      %v463 = vmax.f32 %v445, 0.0
      %v464 = vmax.f32 %v447, 0.0
      %v465 = vld [vmem:[%s3] sm:$0xff]
      %v466 = vld [vmem:[%s3 + $0x8] sm:$0xff]
      %v467 = vld [vmem:[%s3 + $0x10] sm:$0xff]
      %v468 = vld [vmem:[%s3 + $0x18] sm:$0xff]
      %v469 = vld [vmem:[%s3 + $0x20] sm:$0xff]
      %v470 = vld [vmem:[%s3 + $0x28] sm:$0xff]
      %v471 = vld [vmem:[%s3 + $0x30] sm:$0xff]
      %v472 = vld [vmem:[%s3 + $0x38] sm:$0xff]
      %v473 = vld [vmem:[%s3 + $0x40] sm:$0xff]
      %v474 = vld [vmem:[%s3 + $0x48] sm:$0xff]
      %v475 = vld [vmem:[%s3 + $0x50] sm:$0xff]
      %v476 = vld [vmem:[%s3 + $0x58] sm:$0xff]
      %v477 = vld [vmem:[%s3 + $0x60] sm:$0xff]
      %v478 = vld [vmem:[%s3 + $0x68] sm:$0xff]
      %v479 = vld [vmem:[%s3 + $0x70] sm:$0xff]
      %v480 = vld [vmem:[%s3 + $0x78] sm:$0xff]
      %v481 = vld [vmem:[%s3 + $0x80] sm:$0xff]
      %v482 = vld [vmem:[%s3 + $0x88] sm:$0xff]
      %v483 = vld [vmem:[%s3 + $0x90] sm:$0xff]
      %v484 = vld [vmem:[%s3 + $0x98] sm:$0xff]
      %v485 = vld [vmem:[%s3 + $0xa0] sm:$0xff]
      %v486 = vld [vmem:[%s3 + $0xa8] sm:$0xff]
      %v487 = vld [vmem:[%s3 + $0xb0] sm:$0xff]
      %v488 = vld [vmem:[%s3 + $0xb8] sm:$0xff]
      %v489 = vld [vmem:[%s3 + $0xc0] sm:$0xff]
      %v490 = vld [vmem:[%s3 + $0xc8] sm:$0xff]
      %v491 = vld [vmem:[%s3 + $0xd0] sm:$0xff]
      %v492 = vld [vmem:[%s3 + $0xd8] sm:$0xff]
      %v493 = vld [vmem:[%s3 + $0xe0] sm:$0xff]
      %v494 = vld [vmem:[%s3 + $0xe8] sm:$0xff]
      %v495 = vld [vmem:[%s3 + $0xf0] sm:$0xff]
      %v496 = vld [vmem:[%s3 + $0xf8] sm:$0xff]
      %v497 = vld [vmem:[%s3 + $0x100] sm:$0xff]
      %v498 = vld [vmem:[%s3 + $0x108] sm:$0xff]
      %v499 = vld [vmem:[%s3 + $0x110] sm:$0xff]
      %v500 = vld [vmem:[%s3 + $0x118] sm:$0xff]
      %v501 = vld [vmem:[%s3 + $0x120] sm:$0xff]
      %v502 = vld [vmem:[%s3 + $0x128] sm:$0xff]
      %v503 = vld [vmem:[%s3 + $0x130] sm:$0xff]
      %v504 = vld [vmem:[%s3 + $0x138] sm:$0xff]
      %v505 = vld [vmem:[%s3 + $0x140] sm:$0xff]
      %v506 = vld [vmem:[%s3 + $0x148] sm:$0xff]
      %v507 = vld [vmem:[%s3 + $0x150] sm:$0xff]
      %v508 = vld [vmem:[%s3 + $0x158] sm:$0xff]
      %v509 = vld [vmem:[%s3 + $0x160] sm:$0xff]
      %v510 = vld [vmem:[%s3 + $0x168] sm:$0xff]
      %v511 = vld [vmem:[%s3 + $0x170] sm:$0xff]
      %v512 = vld [vmem:[%s3 + $0x178] sm:$0xff]
      %v513 = vld [vmem:[%s3 + $0x180] sm:$0xff]
      %v514 = vld [vmem:[%s3 + $0x188] sm:$0xff]
      %v515 = vld [vmem:[%s3 + $0x190] sm:$0xff]
      %v516 = vld [vmem:[%s3 + $0x198] sm:$0xff]
      %v517 = vld [vmem:[%s3 + $0x1a0] sm:$0xff]
      %v518 = vld [vmem:[%s3 + $0x1a8] sm:$0xff]
      %v519 = vld [vmem:[%s3 + $0x1b0] sm:$0xff]
      %v520 = vld [vmem:[%s3 + $0x1b8] sm:$0xff]
      %v521 = vld [vmem:[%s3 + $0x1c0] sm:$0xff]
      %v522 = vld [vmem:[%s3 + $0x1c8] sm:$0xff]
      %v523 = vld [vmem:[%s3 + $0x1d0] sm:$0xff]
      %v524 = vld [vmem:[%s3 + $0x1d8] sm:$0xff]
      %v525 = vld [vmem:[%s3 + $0x1e0] sm:$0xff]
      %v526 = vld [vmem:[%s3 + $0x1e8] sm:$0xff]
      %v527 = vld [vmem:[%s3 + $0x1f0] sm:$0xff]
      %v528 = vld [vmem:[%s3 + $0x1f8] sm:$0xff]
      %v529 = vld [vmem:[%s4] sm:$0x3]
      %v531 = vlaneseq
      %v532 = vshrl.u32 %v531, 7
      %v533 = vsub.s32 0, %v532
      %v534 = vrot.slane %v529, %v533
      %v535 = vlaneseq
      %v536 = vshrl.u32 %v535, 7
      %v537 = vsub.s32 1, %v536
      %v538 = vrot.slane %v529, %v537
      %541 = vmatprep.subr.mxu0 %v466
      %542 = vmatpush1.msra.mxu0 %v465
      %543 = vmatprep.subr.mxu0 %v468
      %544 = vmatpush1.msra.mxu0 %v467
      %545 = vmatprep.subr.mxu0 %v470
      %546 = vmatpush1.msra.mxu0 %v469
      %547 = vmatprep.subr.mxu0 %v472
      %548 = vmatpush1.msra.mxu0 %v471
      %549 = vmatprep.subr.mxu0 %v474
      %550 = vmatpush1.msra.mxu0 %v473
      %551 = vmatprep.subr.mxu0 %v476
      %552 = vmatpush1.msra.mxu0 %v475
      %553 = vmatprep.subr.mxu0 %v478
      %554 = vmatpush1.msra.mxu0 %v477
      %555 = vmatprep.subr.mxu0 %v480
      %556 = vmatpush1.msra.mxu0 %v479
      %557 = vmatprep.subr.mxu0 %v482
      %558 = vmatpush1.msra.mxu0 %v481
      %559 = vmatprep.subr.mxu0 %v484
      %560 = vmatpush1.msra.mxu0 %v483
      %561 = vmatprep.subr.mxu0 %v486
      %562 = vmatpush1.msra.mxu0 %v485
      %563 = vmatprep.subr.mxu0 %v488
      %564 = vmatpush1.msra.mxu0 %v487
      %565 = vmatprep.subr.mxu0 %v490
      %566 = vmatpush1.msra.mxu0 %v489
      %567 = vmatprep.subr.mxu0 %v492
      %568 = vmatpush1.msra.mxu0 %v491
      %569 = vmatprep.subr.mxu0 %v494
      %570 = vmatpush1.msra.mxu0 %v493
      %571 = vmatprep.subr.mxu0 %v496
      %572 = vmatpush1.msra.mxu0 %v495
      %573 = vmatprep.subr.mxu0 %v498
      %574 = vmatpush1.msra.mxu0 %v497
      %575 = vmatprep.subr.mxu0 %v500
      %576 = vmatpush1.msra.mxu0 %v499
      %577 = vmatprep.subr.mxu0 %v502
      %578 = vmatpush1.msra.mxu0 %v501
      %579 = vmatprep.subr.mxu0 %v504
      %580 = vmatpush1.msra.mxu0 %v503
      %581 = vmatprep.subr.mxu0 %v506
      %582 = vmatpush1.msra.mxu0 %v505
      %583 = vmatprep.subr.mxu0 %v508
      %584 = vmatpush1.msra.mxu0 %v507
      %585 = vmatprep.subr.mxu0 %v510
      %586 = vmatpush1.msra.mxu0 %v509
      %587 = vmatprep.subr.mxu0 %v512
      %588 = vmatpush1.msra.mxu0 %v511
      %589 = vmatprep.subr.mxu0 %v514
      %590 = vmatpush1.msra.mxu0 %v513
      %591 = vmatprep.subr.mxu0 %v516
      %592 = vmatpush1.msra.mxu0 %v515
      %593 = vmatprep.subr.mxu0 %v518
      %594 = vmatpush1.msra.mxu0 %v517
      %595 = vmatprep.subr.mxu0 %v520
      %596 = vmatpush1.msra.mxu0 %v519
      %597 = vmatprep.subr.mxu0 %v522
      %598 = vmatpush1.msra.mxu0 %v521
      %599 = vmatprep.subr.mxu0 %v524
      %600 = vmatpush1.msra.mxu0 %v523
      %601 = vmatprep.subr.mxu0 %v526
      %602 = vmatpush1.msra.mxu0 %v525
      %603 = vmatprep.subr.mxu0 %v528
      %604 = vmatpush1.msra.mxu0 %v527
      %605 = vmatprep.mubr.f32.mxu0 %v450
      %606 = vmatmul.mubr.f32.gmra.mrb[0].mxu0 %v449
      %v607 = vpop.f32.mrb[0].mxu0
      %v608 = vadd.f32 %v534, %v607
      %v609 = vpop.f32.mrb[0].mxu0
      %v610 = vadd.f32 %v538, %v609
      %611 = vmatprep.mubr.f32.mxu0 %v452
      %612 = vmatmul.mubr.f32.gmra.mrb[0].mxu0 %v451
      %v613 = vpop.f32.mrb[0].mxu0
      %v614 = vadd.f32 %v534, %v613
      %v615 = vpop.f32.mrb[0].mxu0
      %v616 = vadd.f32 %v538, %v615
      %617 = vmatprep.mubr.f32.mxu0 %v454
      %618 = vmatmul.mubr.f32.gmra.mrb[0].mxu0 %v453
      %v619 = vpop.f32.mrb[0].mxu0
      %v620 = vadd.f32 %v534, %v619
      %v621 = vpop.f32.mrb[0].mxu0
      %v622 = vadd.f32 %v538, %v621
      %623 = vmatprep.mubr.f32.mxu0 %v456
      %624 = vmatmul.mubr.f32.gmra.mrb[0].mxu0 %v455
      %v625 = vpop.f32.mrb[0].mxu0
      %v626 = vadd.f32 %v534, %v625
      %v627 = vpop.f32.mrb[0].mxu0
      %v628 = vadd.f32 %v538, %v627
      %629 = vmatprep.mubr.f32.mxu0 %v458
      %630 = vmatmul.mubr.f32.gmra.mrb[0].mxu0 %v457
      %v631 = vpop.f32.mrb[0].mxu0
      %v632 = vadd.f32 %v534, %v631
      %v633 = vpop.f32.mrb[0].mxu0
      %v634 = vadd.f32 %v538, %v633
      %635 = vmatprep.mubr.f32.mxu0 %v460
      %636 = vmatmul.mubr.f32.gmra.mrb[0].mxu0 %v459
      %v637 = vpop.f32.mrb[0].mxu0
      %v638 = vadd.f32 %v534, %v637
      %v639 = vpop.f32.mrb[0].mxu0
      %v640 = vadd.f32 %v538, %v639
      %641 = vmatprep.mubr.f32.mxu0 %v462
      %642 = vmatmul.mubr.f32.gmra.mrb[0].mxu0 %v461
      %v643 = vpop.f32.mrb[0].mxu0
      %v644 = vadd.f32 %v534, %v643
      %v645 = vpop.f32.mrb[0].mxu0
      %v646 = vadd.f32 %v538, %v645
      %647 = vmatprep.mubr.f32.mxu0 %v464
      %648 = vmatmul.mubr.f32.gmra.mrb[0].mxu0 %v463
      %v649 = vpop.f32.mrb[0].mxu0
      %v650 = vadd.f32 %v534, %v649
      %v651 = vpop.f32.mrb[0].mxu0
      %v652 = vadd.f32 %v538, %v651
      %653 = vdwg.mxu0
      %v654 = vmax.f32 %v608, 0.0
      %v655 = vmax.f32 %v610, 0.0
      %v656 = vmax.f32 %v614, 0.0
      %v657 = vmax.f32 %v616, 0.0
      %v658 = vmax.f32 %v620, 0.0
      %v659 = vmax.f32 %v622, 0.0
      %v660 = vmax.f32 %v626, 0.0
      %v661 = vmax.f32 %v628, 0.0
      %v662 = vmax.f32 %v632, 0.0
      %v663 = vmax.f32 %v634, 0.0
      %v664 = vmax.f32 %v638, 0.0
      %v665 = vmax.f32 %v640, 0.0
      %v666 = vmax.f32 %v644, 0.0
      %v667 = vmax.f32 %v646, 0.0
      %v668 = vmax.f32 %v650, 0.0
      %v669 = vmax.f32 %v652, 0.0
      %v670 = vld [vmem:[%s5] sm:$0xff]
      %v671 = vld [vmem:[%s5 + $0x8] sm:$0xff]
      %v672 = vld [vmem:[%s5 + $0x10] sm:$0xff]
      %v673 = vld [vmem:[%s5 + $0x18] sm:$0xff]
      %v674 = vld [vmem:[%s5 + $0x20] sm:$0xff]
      %v675 = vld [vmem:[%s5 + $0x28] sm:$0xff]
      %v676 = vld [vmem:[%s5 + $0x30] sm:$0xff]
      %v677 = vld [vmem:[%s5 + $0x38] sm:$0xff]
      %v678 = vld [vmem:[%s5 + $0x40] sm:$0xff]
      %v679 = vld [vmem:[%s5 + $0x48] sm:$0xff]
      %v680 = vld [vmem:[%s5 + $0x50] sm:$0xff]
      %v681 = vld [vmem:[%s5 + $0x58] sm:$0xff]
      %v682 = vld [vmem:[%s5 + $0x60] sm:$0xff]
      %v683 = vld [vmem:[%s5 + $0x68] sm:$0xff]
      %v684 = vld [vmem:[%s5 + $0x70] sm:$0xff]
      %v685 = vld [vmem:[%s5 + $0x78] sm:$0xff]
      %v686 = vld [vmem:[%s5 + $0x80] sm:$0xff]
      %v687 = vld [vmem:[%s5 + $0x88] sm:$0xff]
      %v688 = vld [vmem:[%s5 + $0x90] sm:$0xff]
      %v689 = vld [vmem:[%s5 + $0x98] sm:$0xff]
      %v690 = vld [vmem:[%s5 + $0xa0] sm:$0xff]
      %v691 = vld [vmem:[%s5 + $0xa8] sm:$0xff]
      %v692 = vld [vmem:[%s5 + $0xb0] sm:$0xff]
      %v693 = vld [vmem:[%s5 + $0xb8] sm:$0xff]
      %v694 = vld [vmem:[%s5 + $0xc0] sm:$0xff]
      %v695 = vld [vmem:[%s5 + $0xc8] sm:$0xff]
      %v696 = vld [vmem:[%s5 + $0xd0] sm:$0xff]
      %v697 = vld [vmem:[%s5 + $0xd8] sm:$0xff]
      %v698 = vld [vmem:[%s5 + $0xe0] sm:$0xff]
      %v699 = vld [vmem:[%s5 + $0xe8] sm:$0xff]
      %v700 = vld [vmem:[%s5 + $0xf0] sm:$0xff]
      %v701 = vld [vmem:[%s5 + $0xf8] sm:$0xff]
      %v702 = vld [vmem:[%s5 + $0x100] sm:$0xff]
      %v703 = vld [vmem:[%s5 + $0x108] sm:$0xff]
      %v704 = vld [vmem:[%s5 + $0x110] sm:$0xff]
      %v705 = vld [vmem:[%s5 + $0x118] sm:$0xff]
      %v706 = vld [vmem:[%s5 + $0x120] sm:$0xff]
      %v707 = vld [vmem:[%s5 + $0x128] sm:$0xff]
      %v708 = vld [vmem:[%s5 + $0x130] sm:$0xff]
      %v709 = vld [vmem:[%s5 + $0x138] sm:$0xff]
      %v710 = vld [vmem:[%s5 + $0x140] sm:$0xff]
      %v711 = vld [vmem:[%s5 + $0x148] sm:$0xff]
      %v712 = vld [vmem:[%s5 + $0x150] sm:$0xff]
      %v713 = vld [vmem:[%s5 + $0x158] sm:$0xff]
      %v714 = vld [vmem:[%s5 + $0x160] sm:$0xff]
      %v715 = vld [vmem:[%s5 + $0x168] sm:$0xff]
      %v716 = vld [vmem:[%s5 + $0x170] sm:$0xff]
      %v717 = vld [vmem:[%s5 + $0x178] sm:$0xff]
      %v718 = vld [vmem:[%s5 + $0x180] sm:$0xff]
      %v719 = vld [vmem:[%s5 + $0x188] sm:$0xff]
      %v720 = vld [vmem:[%s5 + $0x190] sm:$0xff]
      %v721 = vld [vmem:[%s5 + $0x198] sm:$0xff]
      %v722 = vld [vmem:[%s5 + $0x1a0] sm:$0xff]
      %v723 = vld [vmem:[%s5 + $0x1a8] sm:$0xff]
      %v724 = vld [vmem:[%s5 + $0x1b0] sm:$0xff]
      %v725 = vld [vmem:[%s5 + $0x1b8] sm:$0xff]
      %v726 = vld [vmem:[%s5 + $0x1c0] sm:$0xff]
      %v727 = vld [vmem:[%s5 + $0x1c8] sm:$0xff]
      %v728 = vld [vmem:[%s5 + $0x1d0] sm:$0xff]
      %v729 = vld [vmem:[%s5 + $0x1d8] sm:$0xff]
      %v730 = vld [vmem:[%s5 + $0x1e0] sm:$0xff]
      %v731 = vld [vmem:[%s5 + $0x1e8] sm:$0xff]
      %v732 = vld [vmem:[%s5 + $0x1f0] sm:$0xff]
      %v733 = vld [vmem:[%s5 + $0x1f8] sm:$0xff]
      %v734 = vld [vmem:[%s6] sm:$0x3]
      %v736 = vlaneseq
      %v737 = vshrl.u32 %v736, 7
      %v738 = vsub.s32 0, %v737
      %v739 = vrot.slane %v734, %v738
      %v740 = vlaneseq
      %v741 = vshrl.u32 %v740, 7
      %v742 = vsub.s32 1, %v741
      %v743 = vrot.slane %v734, %v742
      %746 = vmatprep.subr.mxu0 %v671
      %747 = vmatpush1.msra.mxu0 %v670
      %748 = vmatprep.subr.mxu0 %v673
      %749 = vmatpush1.msra.mxu0 %v672
      %750 = vmatprep.subr.mxu0 %v675
      %751 = vmatpush1.msra.mxu0 %v674
      %752 = vmatprep.subr.mxu0 %v677
      %753 = vmatpush1.msra.mxu0 %v676
      %754 = vmatprep.subr.mxu0 %v679
      %755 = vmatpush1.msra.mxu0 %v678
      %756 = vmatprep.subr.mxu0 %v681
      %757 = vmatpush1.msra.mxu0 %v680
      %758 = vmatprep.subr.mxu0 %v683
      %759 = vmatpush1.msra.mxu0 %v682
      %760 = vmatprep.subr.mxu0 %v685
      %761 = vmatpush1.msra.mxu0 %v684
      %762 = vmatprep.subr.mxu0 %v687
      %763 = vmatpush1.msra.mxu0 %v686
      %764 = vmatprep.subr.mxu0 %v689
      %765 = vmatpush1.msra.mxu0 %v688
      %766 = vmatprep.subr.mxu0 %v691
      %767 = vmatpush1.msra.mxu0 %v690
      %768 = vmatprep.subr.mxu0 %v693
      %769 = vmatpush1.msra.mxu0 %v692
      %770 = vmatprep.subr.mxu0 %v695
      %771 = vmatpush1.msra.mxu0 %v694
      %772 = vmatprep.subr.mxu0 %v697
      %773 = vmatpush1.msra.mxu0 %v696
      %774 = vmatprep.subr.mxu0 %v699
      %775 = vmatpush1.msra.mxu0 %v698
      %776 = vmatprep.subr.mxu0 %v701
      %777 = vmatpush1.msra.mxu0 %v700
      %778 = vmatprep.subr.mxu0 %v703
      %779 = vmatpush1.msra.mxu0 %v702
      %780 = vmatprep.subr.mxu0 %v705
      %781 = vmatpush1.msra.mxu0 %v704
      %782 = vmatprep.subr.mxu0 %v707
      %783 = vmatpush1.msra.mxu0 %v706
      %784 = vmatprep.subr.mxu0 %v709
      %785 = vmatpush1.msra.mxu0 %v708
      %786 = vmatprep.subr.mxu0 %v711
      %787 = vmatpush1.msra.mxu0 %v710
      %788 = vmatprep.subr.mxu0 %v713
      %789 = vmatpush1.msra.mxu0 %v712
      %790 = vmatprep.subr.mxu0 %v715
      %791 = vmatpush1.msra.mxu0 %v714
      %792 = vmatprep.subr.mxu0 %v717
      %793 = vmatpush1.msra.mxu0 %v716
      %794 = vmatprep.subr.mxu0 %v719
      %795 = vmatpush1.msra.mxu0 %v718
      %796 = vmatprep.subr.mxu0 %v721
      %797 = vmatpush1.msra.mxu0 %v720
      %798 = vmatprep.subr.mxu0 %v723
      %799 = vmatpush1.msra.mxu0 %v722
      %800 = vmatprep.subr.mxu0 %v725
      %801 = vmatpush1.msra.mxu0 %v724
      %802 = vmatprep.subr.mxu0 %v727
      %803 = vmatpush1.msra.mxu0 %v726
      %804 = vmatprep.subr.mxu0 %v729
      %805 = vmatpush1.msra.mxu0 %v728
      %806 = vmatprep.subr.mxu0 %v731
      %807 = vmatpush1.msra.mxu0 %v730
      %808 = vmatprep.subr.mxu0 %v733
      %809 = vmatpush1.msra.mxu0 %v732
      %810 = vmatprep.mubr.f32.mxu0 %v655
      %811 = vmatmul.mubr.f32.gmra.mrb[0].mxu0 %v654
      %v812 = vpop.f32.mrb[0].mxu0
      %v813 = vadd.f32 %v739, %v812
      %v814 = vpop.f32.mrb[0].mxu0
      %v815 = vadd.f32 %v743, %v814
      %816 = vmatprep.mubr.f32.mxu0 %v657
      %817 = vmatmul.mubr.f32.gmra.mrb[0].mxu0 %v656
      %v818 = vpop.f32.mrb[0].mxu0
      %v819 = vadd.f32 %v739, %v818
      %v820 = vpop.f32.mrb[0].mxu0
      %v821 = vadd.f32 %v743, %v820
      %822 = vmatprep.mubr.f32.mxu0 %v659
      %823 = vmatmul.mubr.f32.gmra.mrb[0].mxu0 %v658
      %v824 = vpop.f32.mrb[0].mxu0
      %v825 = vadd.f32 %v739, %v824
      %v826 = vpop.f32.mrb[0].mxu0
      %v827 = vadd.f32 %v743, %v826
      %828 = vmatprep.mubr.f32.mxu0 %v661
      %829 = vmatmul.mubr.f32.gmra.mrb[0].mxu0 %v660
      %v830 = vpop.f32.mrb[0].mxu0
      %v831 = vadd.f32 %v739, %v830
      %v832 = vpop.f32.mrb[0].mxu0
      %v833 = vadd.f32 %v743, %v832
      %834 = vmatprep.mubr.f32.mxu0 %v663
      %835 = vmatmul.mubr.f32.gmra.mrb[0].mxu0 %v662
      %v836 = vpop.f32.mrb[0].mxu0
      %v837 = vadd.f32 %v739, %v836
      %v838 = vpop.f32.mrb[0].mxu0
      %v839 = vadd.f32 %v743, %v838
      %840 = vmatprep.mubr.f32.mxu0 %v665
      %841 = vmatmul.mubr.f32.gmra.mrb[0].mxu0 %v664
      %v842 = vpop.f32.mrb[0].mxu0
      %v843 = vadd.f32 %v739, %v842
      %v844 = vpop.f32.mrb[0].mxu0
      %v845 = vadd.f32 %v743, %v844
      %846 = vmatprep.mubr.f32.mxu0 %v667
      %847 = vmatmul.mubr.f32.gmra.mrb[0].mxu0 %v666
      %v848 = vpop.f32.mrb[0].mxu0
      %v849 = vadd.f32 %v739, %v848
      %v850 = vpop.f32.mrb[0].mxu0
      %v851 = vadd.f32 %v743, %v850
      %852 = vmatprep.mubr.f32.mxu0 %v669
      %853 = vmatmul.mubr.f32.gmra.mrb[0].mxu0 %v668
      %v854 = vpop.f32.mrb[0].mxu0
      %v855 = vadd.f32 %v739, %v854
      %v856 = vpop.f32.mrb[0].mxu0
      %v857 = vadd.f32 %v743, %v856
      %858 = vdwg.mxu0
      %859 = vst [vmem:[%s282] sm:$0xff] %v813
      %vm860 = vcmask 523264
      %861 = vst.msk [vmem:[%s282 + $0x8] sm:$0xff] %vm860, %v815
      %862 = vst [vmem:[%s282 + $0x10] sm:$0xff] %v819
      %863 = vst.msk [vmem:[%s282 + $0x18] sm:$0xff] %vm860, %v821
      %864 = vst [vmem:[%s282 + $0x20] sm:$0xff] %v825
      %865 = vst.msk [vmem:[%s282 + $0x28] sm:$0xff] %vm860, %v827
      %866 = vst [vmem:[%s282 + $0x30] sm:$0xff] %v831
      %867 = vst.msk [vmem:[%s282 + $0x38] sm:$0xff] %vm860, %v833
      %868 = vst [vmem:[%s282 + $0x40] sm:$0xff] %v837
      %869 = vst.msk [vmem:[%s282 + $0x48] sm:$0xff] %vm860, %v839
      %870 = vst [vmem:[%s282 + $0x50] sm:$0xff] %v843
      %871 = vst.msk [vmem:[%s282 + $0x58] sm:$0xff] %vm860, %v845
      %872 = vst [vmem:[%s282 + $0x60] sm:$0xff] %v849
      %873 = vst.msk [vmem:[%s282 + $0x68] sm:$0xff] %vm860, %v851
      %874 = vst [vmem:[%s282 + $0x70] sm:$0xff] %v855
      %875 = vst.msk [vmem:[%s282 + $0x78] sm:$0xff] %vm860, %v857
      %s876 = smul.u32 8, %s18
      %p877 = scmp.lt.s32.totalorder %s876, 31
      %s878 = scalar_select %p877, %s876, 31
      %s879 = smul.addr %s878, 2
      %s880 = smul.addr %s879, 8
      %s881 = scalar_lea.vmem %s7, %s880
      // Predicated region
      $region49: #{dense_encoder_forward.1} parent=47 // pred_check
        %p882 = pneg %p188
      $region50: #{dense_encoder_forward.1} parent=47 // pred_check_branch
        %884 = sbr.rel (%p882) target = $region52
      $region51: #{dense_encoder_forward.1} parent=47 // pred_region
        %s885 = smul.u32 8, %s18
      $region52: #{dense_encoder_forward.1} parent=47 // pred_fallthru
        _
    $region48: #{dense_encoder_forward.1} parent=5 // pred_fallthru
      _
    %p886 = scmp.le.s32.totalorder 2, %s13
    // Predicated region
    $region53: #{dense_encoder_forward.1} parent=5 // pred_check
      %p887 = pneg %p886
    $region54: #{dense_encoder_forward.1} parent=5 // pred_check_branch
      %889 = sbr.rel (%p887) target = $region56
    $region55: #{dense_encoder_forward.1} parent=5 // pred_region
      %s890 = ssub.s32 %s13, 2
      // Predicated region
      $region57: #{dense_encoder_forward.1} parent=55 // pred_check
        %p891 = pneg %p194
      $region58: #{dense_encoder_forward.1} parent=55 // pred_check_branch
        %893 = sbr.rel (%p891) target = $region60
      $region59: #{dense_encoder_forward.1} parent=55 // pred_region
        %s894 = smul.u32 8, %s19
        %p895 = scmp.lt.s32.totalorder %s894, 31
        %s896 = scalar_select %p895, %s894, 31
        %s897 = smul.addr %s896, 2
        %s898 = smul.addr %s897, 8
        %s899 = scalar_lea.vmem %s7, %s898
      $region60: #{dense_encoder_forward.1} parent=55 // pred_fallthru
        _
    $region56: #{dense_encoder_forward.1} parent=5 // pred_fallthru
      _
  $region6: #{dense_encoder_forward.1} parent=0 // loop_footer
    %s17 = sadd.s32 1, %s13
  $region7: #{dense_encoder_forward.1} parent=0 // loop_footer_branch
    %12 = sbr.rel target = $region3
  $region8: #{dense_encoder_forward.1} parent=0 // loop_exit
    _

</llo_original>
